<compile_context>
chip_gen: v7x
topology: tpu7x:2x2x1
jax: 0.10.0
libtpu: 0.0.40
codegen_flags: <defaults>
</compile_context>

<pallas_src>
import functools
import math

import jax
import jax.numpy as jnp
from jax.experimental import pallas as pl
from jax.experimental.pallas import tpu as pltpu

LN_EPS = 1e-12


# ----------------------------- VMEM budget ------------------------------

def _detect_vmem_limit():
    """Per-generation VMEM limit: leave headroom for compiler scratch/double-buffering."""
    cap = None
    try:
        info = pltpu.get_tpu_info()
        for attr in ("vmem_capacity_bytes", "vmem_bytes", "vmem_size_bytes"):
            v = getattr(info, attr, None)
            if v:
                cap = int(v)
                break
    except Exception:
        cap = None
    if not cap or cap <= 0:
        cap = 64 * 1024 * 1024          # conservative fallback (v7x physical)
    lim = min(int(cap * 0.85), cap - 8 * 1024 * 1024)
    return max(lim, 16 * 1024 * 1024) if cap >= 32 * 1024 * 1024 else cap


VMEM_LIMIT = _detect_vmem_limit()
_TILE_BUDGET = int(VMEM_LIMIT * 0.6)     # budget used when sizing GEMM tiles


# ----------------------------- helpers ------------------------------

def _gelu(x):
    # TODO(synk): reference BERT uses erf-GELU; tanh approximation used here (Mosaic-safe).
    return 0.5 * x * (1.0 + jnp.tanh(0.7978845608028654 * (x + 0.044715 * x * x * x)))


def _epilogue(y, act):
    if act == "gelu":
        return _gelu(y)
    if act == "tanh":
        return jnp.tanh(y)
    return y


def _tile(dim, prefs):
    """Largest preferred tile that evenly divides `dim`, else the full dim."""
    for p in prefs:
        if dim >= p and dim % p == 0:
            return p
    return dim


def _k_candidates(K):
    """Full K first (preferred), then large 128-multiples that divide K."""
    return [K] + [t for t in (2048, 1536, 1024, 768, 512, 384, 256, 128)
                  if t < K and K % t == 0]


def _choose_gemm_tiles(M, N, K, x_bytes, w_bytes, out_bytes):
    tm_c = [t for t in (512, 256, 128) if M % t == 0] or [M]
    tn_c = [t for t in (512, 256, 128) if N % t == 0] or [N]
    tk_c = _k_candidates(K)
    for tm in tm_c:
        for tn in tn_c:
            for tk in tk_c:
                foot = 2 * (tm * tk * x_bytes + tk * tn * w_bytes)   # dbl-buffered x, w
                foot += 2 * tm * tn * out_bytes                      # dbl-buffered out
                foot += 2 * tn * 4                                   # bias
                if tk < K:
                    foot += tm * tn * 4                              # f32 accumulator
                if foot <= _TILE_BUDGET:
                    return tm, tn, tk
    return tm_c[-1], tn_c[-1], tk_c[-1]


def _choose_res_ln_tiles(M, N, K):
    tm_c = [t for t in (512, 256, 128) if M % t == 0] or [M]
    tk_c = _k_candidates(K)
    for tm in tm_c:
        for tk in tk_c:
            foot = 2 * (tm * tk * 2 + tk * N * 2)    # x, w (bf16), dbl-buffered
            foot += 2 * tm * N * 2                   # out bf16
            foot += 2 * tm * N * 2                   # residual bf16
            foot += 6 * N * 4                        # bias / gamma / beta (f32)
            if tk < K:
                foot += tm * N * 4                   # f32 accumulator
            if foot <= _TILE_BUDGET:
                return tm, tk
    return tm_c[-1], tk_c[-1]


def _heads_per_block(n_heads, dh):
    """Largest divisor-of-n_heads group whose width hb*dh is lane-dense and <= 512 lanes."""
    cands = [hb for hb in range(1, n_heads + 1)
             if n_heads % hb == 0 and (hb * dh) % 128 == 0]
    if not cands:
        return n_heads, False            # tiny-H fallback: process all heads, full 3H block
    small = [hb for hb in cands if hb * dh <= 512]
    return (max(small) if small else min(cands)), True


def _write_group(hb, dh, grouped):
    """Heads per aligned output store (wg*dh multiple of 128, wg divides hb)."""
    if not grouped:
        return hb
    if dh % 128 == 0:
        return 1
    wg = 128 // dh
    if wg >= 1 and wg * dh == 128 and hb % wg == 0:
        return wg
    return hb


# ----------------------------- Pallas kernels ------------------------------

def linear_kernel(x_ref, w_ref, b_ref, o_ref, *scratch, act, multi_k):
    """GEMM with bias + optional activation epilogue. Full-K (no scratch) or K-accumulated."""
    if multi_k:
        acc_ref = scratch[0]

        @pl.when(pl.program_id(2) == 0)
        def _():
            acc_ref[...] = jnp.zeros_like(acc_ref)

        acc_ref[...] += jnp.dot(
            x_ref[...].astype(jnp.bfloat16), w_ref[...].astype(jnp.bfloat16),
            preferred_element_type=jnp.float32)

        @pl.when(pl.program_id(2) == pl.num_programs(2) - 1)
        def _():
            o_ref[...] = _epilogue(acc_ref[...] + b_ref[...], act).astype(o_ref.dtype)
    else:
        y = jnp.dot(x_ref[...].astype(jnp.bfloat16), w_ref[...].astype(jnp.bfloat16),
                    preferred_element_type=jnp.float32) + b_ref[...]
        o_ref[...] = _epilogue(y, act).astype(o_ref.dtype)


def linear_res_ln_kernel(x_ref, w_ref, b_ref, res_ref, g_ref, beta_ref, o_ref,
                         *scratch, multi_k):
    """GEMM whose epilogue fuses bias + residual add + LayerNorm (output tile spans full H)."""
    def finalize(y):
        y = y + b_ref[...] + res_ref[...].astype(jnp.float32)
        mu = jnp.mean(y, axis=-1, keepdims=True)
        var = jnp.mean((y - mu) ** 2, axis=-1, keepdims=True)
        return ((y - mu) * jax.lax.rsqrt(var + LN_EPS) * g_ref[...]
                + beta_ref[...]).astype(o_ref.dtype)

    if multi_k:
        acc_ref = scratch[0]

        @pl.when(pl.program_id(1) == 0)
        def _():
            acc_ref[...] = jnp.zeros_like(acc_ref)

        acc_ref[...] += jnp.dot(
            x_ref[...].astype(jnp.bfloat16), w_ref[...].astype(jnp.bfloat16),
            preferred_element_type=jnp.float32)

        @pl.when(pl.program_id(1) == pl.num_programs(1) - 1)
        def _():
            o_ref[...] = finalize(acc_ref[...])
    else:
        o_ref[...] = finalize(
            jnp.dot(x_ref[...].astype(jnp.bfloat16), w_ref[...].astype(jnp.bfloat16),
                    preferred_element_type=jnp.float32))


def emb_ln_kernel(we_ref, te_ref, pe_ref, g_ref, b_ref, o_ref):
    """word + type + position embedding sum (f32), then LayerNorm; bf16 out (row-tiled)."""
    x = (we_ref[...].astype(jnp.float32) + te_ref[...].astype(jnp.float32)
         + pe_ref[...].astype(jnp.float32)[None])
    mu = jnp.mean(x, axis=-1, keepdims=True)
    var = jnp.mean((x - mu) ** 2, axis=-1, keepdims=True)
    o_ref[...] = ((x - mu) * jax.lax.rsqrt(var + LN_EPS) * g_ref[...]
                  + b_ref[...]).astype(o_ref.dtype)


def attention_kernel(q_ref, k_ref, v_ref, m_ref, o_ref, *, hb, dh, scale,
                     q_col, k_col, v_col, wg):
    """Softmax attention for `hb` heads of one batch element.

    Heads are processed in write-groups of `wg` heads: all QK^T dots of a group are issued
    before the softmax/PV phase, and each group's result is stored directly into o_ref at a
    128-lane-aligned column offset (no trailing full-width concatenate).
    """
    q_all = q_ref[0]                    # (S, blk) or (S, 3H) in the tiny-H fallback
    k_all = k_ref[0]
    v_all = v_ref[0]
    mask = m_ref[0]                     # (1, S) f32

    for g0 in range(0, hb, wg):         # static unroll
        scores = []
        for h in range(g0, g0 + wg):    # MXU phase: all QK^T of this write-group
            q = q_all[:, q_col + h * dh: q_col + (h + 1) * dh]
            k = k_all[:, k_col + h * dh: k_col + (h + 1) * dh]
            s = jax.lax.dot_general(q, k, dimension_numbers=(((1,), (1,)), ((), ())),
                                    preferred_element_type=jnp.float32)
            scores.append(s * scale + mask)
        outs = []
        for idx, h in enumerate(range(g0, g0 + wg)):   # softmax + PV phase
            s = scores[idx]
            s = s - jnp.max(s, axis=-1, keepdims=True)
            p = jnp.exp(s)
            p = p * pl.reciprocal(jnp.sum(p, axis=-1, keepdims=True), approx=True)
            v = v_all[:, v_col + h * dh: v_col + (h + 1) * dh]
            outs.append(jnp.dot(p.astype(v.dtype), v, preferred_element_type=jnp.float32))
        chunk = outs[0] if len(outs) == 1 else jnp.concatenate(outs, axis=-1)
        o_ref[0, :, g0 * dh:(g0 + wg) * dh] = chunk.astype(o_ref.dtype)


# ----------------------------- Pallas wrappers ------------------------------

def pallas_linear(x, w, b, act="none", out_dtype=jnp.bfloat16):
    M, K = x.shape
    _, N = w.shape
    ob = jnp.dtype(out_dtype).itemsize
    tm, tn, tk = _choose_gemm_tiles(M, N, K, x.dtype.itemsize, w.dtype.itemsize, ob)
    multi_k = tk < K

    if multi_k:
        grid = (M // tm, N // tn, K // tk)
        in_specs = [
            pl.BlockSpec((tm, tk), lambda i, j, k: (i, k)),
            pl.BlockSpec((tk, tn), lambda i, j, k: (k, j)),
            pl.BlockSpec((1, tn), lambda i, j, k: (0, j)),
        ]
        out_spec = pl.BlockSpec((tm, tn), lambda i, j, k: (i, j))
        scratch = [pltpu.VMEM((tm, tn), jnp.float32)]
        dims = ("parallel", "parallel", "arbitrary")
        bytes_accessed = (x.size * x.dtype.itemsize * (N // tn)
                          + w.size * w.dtype.itemsize * (M // tm)
                          + b.size * 4 + M * N * ob)
    else:
        grid = (M // tm, N // tn)
        in_specs = [
            pl.BlockSpec((tm, K), lambda i, j: (i, 0)),   # x panel resident across j
            pl.BlockSpec((K, tn), lambda i, j: (0, j)),
            pl.BlockSpec((1, tn), lambda i, j: (0, j)),
        ]
        out_spec = pl.BlockSpec((tm, tn), lambda i, j: (i, j))
        scratch = []
        dims = ("parallel", "parallel")
        bytes_accessed = (x.size * x.dtype.itemsize
                          + w.size * w.dtype.itemsize * (M // tm)
                          + b.size * 4 + M * N * ob)

    return pl.pallas_call(
        functools.partial(linear_kernel, act=act, multi_k=multi_k),
        out_shape=jax.ShapeDtypeStruct((M, N), out_dtype),
        grid_spec=pltpu.PrefetchScalarGridSpec(
            num_scalar_prefetch=0, grid=grid,
            in_specs=in_specs, out_specs=out_spec, scratch_shapes=scratch),
        compiler_params=pltpu.CompilerParams(
            dimension_semantics=dims, vmem_limit_bytes=VMEM_LIMIT),
        cost_estimate=pl.CostEstimate(
            flops=2 * M * N * K,
            transcendentals=(M * N if act != "none" else 0),
            bytes_accessed=int(bytes_accessed)),
    )(x, w, b.reshape(1, N))


def pallas_linear_res_ln(x, w, b, res, g, beta):
    """out = LayerNorm(x @ w + b + res), bf16 output; residual+LN fused into the epilogue."""
    M, K = x.shape
    _, N = w.shape                       # N == hidden, kept whole per output tile
    tm, tk = _choose_res_ln_tiles(M, N, K)
    multi_k = tk < K

    if multi_k:
        grid = (M // tm, K // tk)
        in_specs = [
            pl.BlockSpec((tm, tk), lambda i, k: (i, k)),     # x
            pl.BlockSpec((tk, N), lambda i, k: (k, 0)),      # w
            pl.BlockSpec((1, N), lambda i, k: (0, 0)),       # bias
            pl.BlockSpec((tm, N), lambda i, k: (i, 0)),      # residual
            pl.BlockSpec((1, N), lambda i, k: (0, 0)),       # gamma
            pl.BlockSpec((1, N), lambda i, k: (0, 0)),       # beta
        ]
        out_spec = pl.BlockSpec((tm, N), lambda i, k: (i, 0))
        scratch = [pltpu.VMEM((tm, N), jnp.float32)]
        dims = ("parallel", "arbitrary")
        bytes_accessed = (x.size * x.dtype.itemsize
                          + w.size * w.dtype.itemsize * (M // tm)
                          + res.size * res.dtype.itemsize + 2 * M * N * 2)
    else:
        grid = (M // tm,)
        in_specs = [
            pl.BlockSpec((tm, K), lambda i: (i, 0)),         # x
            pl.BlockSpec((K, N), lambda i: (0, 0)),          # w (resident)
            pl.BlockSpec((1, N), lambda i: (0, 0)),          # bias
            pl.BlockSpec((tm, N), lambda i: (i, 0)),         # residual
            pl.BlockSpec((1, N), lambda i: (0, 0)),          # gamma
            pl.BlockSpec((1, N), lambda i: (0, 0)),          # beta
        ]
        out_spec = pl.BlockSpec((tm, N), lambda i: (i, 0))
        scratch = []
        dims = ("parallel",)
        bytes_accessed = (x.size * x.dtype.itemsize + w.size * w.dtype.itemsize
                          + res.size * res.dtype.itemsize + 2 * M * N * 2)

    return pl.pallas_call(
        functools.partial(linear_res_ln_kernel, multi_k=multi_k),
        out_shape=jax.ShapeDtypeStruct((M, N), jnp.bfloat16),
        grid_spec=pltpu.PrefetchScalarGridSpec(
            num_scalar_prefetch=0, grid=grid,
            in_specs=in_specs, out_specs=out_spec, scratch_shapes=scratch),
        compiler_params=pltpu.CompilerParams(
            dimension_semantics=dims, vmem_limit_bytes=VMEM_LIMIT),
        cost_estimate=pl.CostEstimate(
            flops=2 * M * N * K, transcendentals=M,
            bytes_accessed=int(bytes_accessed)),
    )(x, w, b.reshape(1, N), res, g, beta)


def pallas_emb_layernorm(we, te, pe, g, b):
    B, S, H = we.shape
    ts = _tile(S, (512, 256, 128))
    grid = (B, S // ts)
    return pl.pallas_call(
        emb_ln_kernel,
        out_shape=jax.ShapeDtypeStruct((B, S, H), jnp.bfloat16),
        grid_spec=pltpu.PrefetchScalarGridSpec(
            num_scalar_prefetch=0, grid=grid,
            in_specs=[
                pl.BlockSpec((1, ts, H), lambda bi, si: (bi, si, 0)),
                pl.BlockSpec((1, ts, H), lambda bi, si: (bi, si, 0)),
                pl.BlockSpec((ts, H), lambda bi, si: (si, 0)),   # pos table (S,H), no B dup
                pl.BlockSpec((1, H), lambda bi, si: (0, 0)),
                pl.BlockSpec((1, H), lambda bi, si: (0, 0)),
            ],
            out_specs=pl.BlockSpec((1, ts, H), lambda bi, si: (bi, si, 0)),
        ),
        compiler_params=pltpu.CompilerParams(
            dimension_semantics=("parallel", "parallel"),
            vmem_limit_bytes=VMEM_LIMIT),
    )(we, te, pe, g, b)


def pallas_attention(qkv, mask, n_heads, dh):
    """qkv: (B, S, 3H) bf16 (fused Q|K|V projection); mask: (B, 1, S) f32 -> (B, S, H) bf16.

    Q/K/V are never sliced out in the wrapper: each head-group block is read straight from
    the (B, S, 3H) buffer with index_maps offset into the correct third.
    """
    B, S, H3 = qkv.shape
    H = H3 // 3
    hb, grouped = _heads_per_block(n_heads, dh)
    wg = _write_group(hb, dh, grouped)
    scale = 1.0 / math.sqrt(dh)

    if grouped:
        blk = hb * dh
        n_grp = n_heads // hb
        grid = (B, n_grp)
        q_spec = pl.BlockSpec((1, S, blk), lambda b, g: (b, 0, g))
        k_spec = pl.BlockSpec((1, S, blk), lambda b, g: (b, 0, g + n_grp))
        v_spec = pl.BlockSpec((1, S, blk), lambda b, g: (b, 0, g + 2 * n_grp))
        out_spec = pl.BlockSpec((1, S, blk), lambda b, g: (b, 0, g))
        q_col, k_col, v_col = 0, 0, 0
    else:
        # Tiny-H fallback: one full (S, 3H) block, kernel slices Q/K/V internally.
        grid = (B, 1)
        full = pl.BlockSpec((1, S, H3), lambda b, g: (b, 0, 0))
        q_spec = k_spec = v_spec = full
        out_spec = pl.BlockSpec((1, S, H), lambda b, g: (b, 0, 0))
        q_col, k_col, v_col = 0, H, 2 * H

    return pl.pallas_call(
        functools.partial(attention_kernel, hb=hb, dh=dh, scale=scale,
                          q_col=q_col, k_col=k_col, v_col=v_col, wg=wg),
        out_shape=jax.ShapeDtypeStruct((B, S, H), jnp.bfloat16),
        grid_spec=pltpu.PrefetchScalarGridSpec(
            num_scalar_prefetch=0, grid=grid,
            in_specs=[q_spec, k_spec, v_spec,
                      pl.BlockSpec((1, 1, S), lambda b, g: (b, 0, 0))],
            out_specs=out_spec,
        ),
        compiler_params=pltpu.CompilerParams(
            dimension_semantics=("parallel", "parallel"),
            vmem_limit_bytes=VMEM_LIMIT),
    )(qkv, qkv, qkv, mask)


# ----------------------------- Model definition ------------------------------

def init_params(key, cfg):
    H, I = cfg["hidden"], cfg["intermediate"]
    keys = iter(jax.random.split(key, 8 + 16 * cfg["num_layers"]))

    def normal(shape, scale=0.02):
        return scale * jax.random.normal(next(keys), shape, jnp.float32)

    params = {
        "word_emb": normal((cfg["vocab_size"], H)).astype(jnp.bfloat16),
        "pos_emb": normal((cfg["max_position"], H)).astype(jnp.bfloat16),
        "type_emb": normal((cfg["type_vocab"], H)).astype(jnp.bfloat16),
        "emb_ln_g": 1.0 + normal((1, H)),
        "emb_ln_b": normal((1, H)),
        "pool_w": normal((H, H)).astype(jnp.bfloat16),
        "pool_b": normal((H,)),
        "layers": [],
    }
    for _ in range(cfg["num_layers"]):
        wq, wk, wv = normal((H, H)), normal((H, H)), normal((H, H))
        params["layers"].append({
            "w_qkv": jnp.concatenate([wq, wk, wv], axis=1).astype(jnp.bfloat16),
            "b_qkv": normal((3 * H,)),
            "wo": normal((H, H)).astype(jnp.bfloat16), "bo": normal((H,)),
            "ln1_g": 1.0 + normal((1, H)), "ln1_b": normal((1, H)),
            "wi": normal((H, I)).astype(jnp.bfloat16), "bi": normal((I,)),
            "wo2": normal((I, H)).astype(jnp.bfloat16), "bo2": normal((H,)),
            "ln2_g": 1.0 + normal((1, H)), "ln2_b": normal((1, H)),
        })
    return params


def bert_forward(params, cfg, input_ids, token_type_ids=None, attention_mask=None,
                 output_all_encoded_layers=True):
    B, S = input_ids.shape
    H, nH = cfg["hidden"], cfg["num_heads"]
    dh = H // nH
    M = B * S

    if attention_mask is None:
        attention_mask = jnp.ones_like(input_ids)
    if token_type_ids is None:
        token_type_ids = jnp.zeros_like(input_ids)

    # extended attention mask: (1 - mask) * -10000, kept as (B, 1, S) — NOT per-head
    ext_mask = ((1.0 - attention_mask.astype(jnp.float32)) * -10000.0)[:, None, :]

    # --- embeddings: gathers are plain JAX glue (bf16 tables); sum + LN is a Pallas kernel ---
    # TODO(synk): fuse the row gathers into the kernel via scalar-prefetched ids + manual DMA.
    we = params["word_emb"][input_ids]                 # (B, S, H) bf16
    te = params["type_emb"][token_type_ids]            # (B, S, H) bf16
    pe = params["pos_emb"][:S]                         # (S, H) bf16, broadcast inside kernel
    x = pallas_emb_layernorm(we, te, pe, params["emb_ln_g"], params["emb_ln_b"])
    x = x.reshape(M, H)                                # bf16 residual stream

    encoded = []
    for lyr in params["layers"]:
        # fused Q|K|V projection (one GEMM, bf16 output); never sliced in the wrapper
        qkv = pallas_linear(x, lyr["w_qkv"], lyr["b_qkv"], out_dtype=jnp.bfloat16)
        ctx = pallas_attention(qkv.reshape(B, S, 3 * H), ext_mask, nH, dh)   # (B, S, H) bf16

        # attention output projection with fused bias + residual + LayerNorm
        x = pallas_linear_res_ln(ctx.reshape(M, H), lyr["wo"], lyr["bo"],
                                 x, lyr["ln1_g"], lyr["ln1_b"])

        # FFN: intermediate GEMM (+GELU) then output GEMM with fused residual + LayerNorm
        inter = pallas_linear(x, lyr["wi"], lyr["bi"], act="gelu", out_dtype=jnp.bfloat16)
        x = pallas_linear_res_ln(inter, lyr["wo2"], lyr["bo2"],
                                 x, lyr["ln2_g"], lyr["ln2_b"])

        encoded.append(x.reshape(B, S, H))

    pooled = pallas_linear(encoded[-1][:, 0, :], params["pool_w"], params["pool_b"],
                           act="tanh", out_dtype=jnp.float32)

    if not output_all_encoded_layers:
        return encoded[-1], pooled
    return encoded, pooled


# ----------------------------- pure-JAX reference ------------------------------

def ref_forward(params, cfg, input_ids, token_type_ids=None, attention_mask=None):
    B, S = input_ids.shape
    H, nH = cfg["hidden"], cfg["num_heads"]
    dh = H // nH
    if attention_mask is None:
        attention_mask = jnp.ones_like(input_ids)
    if token_type_ids is None:
        token_type_ids = jnp.zeros_like(input_ids)

    def ln(x, g, b):
        mu = jnp.mean(x, axis=-1, keepdims=True)
        var = jnp.mean((x - mu) ** 2, axis=-1, keepdims=True)
        return (x - mu) * jax.lax.rsqrt(var + LN_EPS) * g + b

    def mm(a, w):   # mirrors the kernel: bf16 MXU inputs, f32 accumulation
        return jnp.dot(a.astype(jnp.bfloat16), w.astype(jnp.bfloat16),
                       preferred_element_type=jnp.float32)

    ext = (1.0 - attention_mask.astype(jnp.float32)) * -10000.0          # (B, S)
    emb = (params["word_emb"][input_ids].astype(jnp.float32)
           + params["pos_emb"][:S][None].astype(jnp.float32)
           + params["type_emb"][token_type_ids].astype(jnp.float32))
    x = ln(emb, params["emb_ln_g"], params["emb_ln_b"]).astype(jnp.bfloat16)   # (B, S, H)

    for lyr in params["layers"]:
        xf = x.reshape(B * S, H)                                          # bf16
        qkv = (mm(xf, lyr["w_qkv"]) + lyr["b_qkv"]).astype(jnp.bfloat16)
        q = qkv[:, :H].reshape(B, S, nH, dh).transpose(0, 2, 1, 3)
        k = qkv[:, H:2 * H].reshape(B, S, nH, dh).transpose(0, 2, 1, 3)
        v = qkv[:, 2 * H:].reshape(B, S, nH, dh).transpose(0, 2, 1, 3)
        s = jnp.einsum("bhqd,bhkd->bhqk", q, k,
                       preferred_element_type=jnp.float32) / math.sqrt(dh)
        s = s + ext[:, None, None, :]
        p = jax.nn.softmax(s, axis=-1)
        ctx = jnp.einsum("bhqk,bhkd->bhqd", p.astype(jnp.bfloat16), v,
                         preferred_element_type=jnp.float32)
        ctx = ctx.transpose(0, 2, 1, 3).reshape(B * S, H).astype(jnp.bfloat16)
        x1 = ln(mm(ctx, lyr["wo"]) + lyr["bo"] + xf.astype(jnp.float32),
                lyr["ln1_g"], lyr["ln1_b"]).astype(jnp.bfloat16)
        inter = _gelu(mm(x1, lyr["wi"]) + lyr["bi"]).astype(jnp.bfloat16)
        x = ln(mm(inter, lyr["wo2"]) + lyr["bo2"] + x1.astype(jnp.float32),
               lyr["ln2_g"], lyr["ln2_b"]).astype(jnp.bfloat16)
        x = x.reshape(B, S, H)

    pooled = jnp.tanh(mm(x[:, 0, :], params["pool_w"]) + params["pool_b"])
    return x, pooled


# ----------------------------- main ------------------------------

def _run_and_check(cfg, B, S, seed):
    key = jax.random.PRNGKey(seed)
    k_param, k_ids, k_tok = jax.random.split(key, 3)
    params = init_params(k_param, cfg)
    input_ids = jax.random.randint(k_ids, (B, S), 0, cfg["vocab_size"], dtype=jnp.int32)
    token_type_ids = jax.random.randint(k_tok, (B, S), 0, cfg["type_vocab"], dtype=jnp.int32)
    attention_mask = jnp.ones((B, S), dtype=jnp.int32).at[1, -2:].set(0)  # exercise masking

    encoded_layers, pooled = bert_forward(params, cfg, input_ids, token_type_ids,
                                          attention_mask, output_all_encoded_layers=True)
    jax.block_until_ready(pooled)
    jax.block_until_ready(encoded_layers[-1])

    ref_last, ref_pooled = ref_forward(params, cfg, input_ids, token_type_ids, attention_mask)
    assert encoded_layers[-1].shape == (B, S, cfg["hidden"])
    assert pooled.shape == (B, cfg["hidden"])
    err_x = float(jnp.max(jnp.abs(encoded_layers[-1].astype(jnp.float32)
                                  - ref_last.astype(jnp.float32))))
    err_p = float(jnp.max(jnp.abs(pooled - ref_pooled)))
    assert jnp.allclose(encoded_layers[-1].astype(jnp.float32),
                        ref_last.astype(jnp.float32), atol=2e-2, rtol=2e-2), err_x
    assert jnp.allclose(pooled, ref_pooled, atol=2e-2, rtol=2e-2), err_p


if __name__ == "__main__":
    # Config 1: tiny shapes (exercises the small-H fallback paths, full-dim blocks).
    cfg_small = dict(vocab_size=30, hidden=32, num_layers=2, num_heads=4,
                     intermediate=64, max_position=16, type_vocab=2)
    _run_and_check(cfg_small, B=2, S=8, seed=0)

    # Config 2: lane-dense shapes (exercises grouped-head attention reading from the fused
    # (B, S, 3H) QKV buffer and 128-aligned tiled GEMM paths).
    cfg_mid = dict(vocab_size=50, hidden=256, num_layers=1, num_heads=2,
                   intermediate=512, max_position=128, type_vocab=2)
    _run_and_check(cfg_mid, B=2, S=128, seed=1)

    print("KERNEL_OK")
</pallas_src>

<mosaic_0001>
module attributes {stable_mosaic.version = 11 : i64} {
  func.func @emb_ln_kernel(%arg0: i32, %arg1: i32, %arg2: memref<1x8x32xbf16, #tpu.memory_space<vmem>>, %arg3: memref<1x8x32xbf16, #tpu.memory_space<vmem>>, %arg4: memref<8x32xbf16, #tpu.memory_space<vmem>>, %arg5: memref<1x32xf32, #tpu.memory_space<vmem>>, %arg6: memref<1x32xf32, #tpu.memory_space<vmem>>, %arg7: memref<1x8x32xbf16, #tpu.memory_space<vmem>>) attributes {dimension_semantics = [#tpu.dimension_semantics<parallel>, #tpu.dimension_semantics<parallel>], iteration_bounds = array<i64: 2, 1>, scalar_prefetch = 0 : i64, scratch_operands = 0 : i64, tpu.core_type = #tpu.core_type<tc>, window_params = [{transform_indices = @transform_0, window_bounds = array<i64: 1, 8, 32>}, {transform_indices = @transform_1, window_bounds = array<i64: 1, 8, 32>}, {transform_indices = @transform_2, window_bounds = array<i64: 8, 32>}, {pipeline_mode = #tpu.pipeline_mode<synchronous>, transform_indices = @transform_3, window_bounds = array<i64: 1, 32>}, {pipeline_mode = #tpu.pipeline_mode<synchronous>, transform_indices = @transform_4, window_bounds = array<i64: 1, 32>}, {transform_indices = @transform_5, window_bounds = array<i64: 1, 8, 32>}]} {
    %c0 = arith.constant 0 : index
    %c0_0 = arith.constant 0 : index
    %c0_1 = arith.constant 0 : index
    %0 = vector.load %arg2[%c0, %c0_0, %c0_1] : memref<1x8x32xbf16, #tpu.memory_space<vmem>>, vector<1x8x32xbf16>
    %1 = arith.extf %0 : vector<1x8x32xbf16> to vector<1x8x32xf32>
    %c0_2 = arith.constant 0 : index
    %c0_3 = arith.constant 0 : index
    %c0_4 = arith.constant 0 : index
    %2 = vector.load %arg3[%c0_2, %c0_3, %c0_4] : memref<1x8x32xbf16, #tpu.memory_space<vmem>>, vector<1x8x32xbf16>
    %3 = arith.extf %2 : vector<1x8x32xbf16> to vector<1x8x32xf32>
    %4 = arith.addf %1, %3 : vector<1x8x32xf32>
    %c0_5 = arith.constant 0 : index
    %c0_6 = arith.constant 0 : index
    %5 = vector.load %arg4[%c0_5, %c0_6] : memref<8x32xbf16, #tpu.memory_space<vmem>>, vector<8x32xbf16>
    %6 = arith.extf %5 : vector<8x32xbf16> to vector<8x32xf32>
    %7 = vector.shape_cast %6 : vector<8x32xf32> to vector<1x8x32xf32>
    %8 = arith.addf %4, %7 : vector<1x8x32xf32>
    %cst = arith.constant dense<0.000000e+00> : vector<1x8xf32>
    %9 = vector.multi_reduction <add>, %8, %cst [2] : vector<1x8x32xf32> to vector<1x8xf32>
    %10 = vector.shape_cast %9 : vector<1x8xf32> to vector<1x8x1xf32>
    %cst_7 = arith.constant 3.200000e+01 : f32
    %11 = vector.broadcast %cst_7 : f32 to vector<1x8x1xf32>
    %12 = arith.divf %10, %11 : vector<1x8x1xf32>
    %13 = vector.broadcast %12 : vector<1x8x1xf32> to vector<1x8x32xf32>
    %14 = arith.subf %8, %13 : vector<1x8x32xf32>
    %15 = arith.mulf %14, %14 : vector<1x8x32xf32>
    %cst_8 = arith.constant dense<0.000000e+00> : vector<1x8xf32>
    %16 = vector.multi_reduction <add>, %15, %cst_8 [2] : vector<1x8x32xf32> to vector<1x8xf32>
    %17 = vector.shape_cast %16 : vector<1x8xf32> to vector<1x8x1xf32>
    %cst_9 = arith.constant 3.200000e+01 : f32
    %18 = vector.broadcast %cst_9 : f32 to vector<1x8x1xf32>
    %19 = arith.divf %17, %18 : vector<1x8x1xf32>
    %20 = vector.broadcast %12 : vector<1x8x1xf32> to vector<1x8x32xf32>
    %21 = arith.subf %8, %20 : vector<1x8x32xf32>
    %cst_10 = arith.constant 9.99999996E-13 : f32
    %22 = vector.broadcast %cst_10 : f32 to vector<1x8x1xf32>
    %23 = arith.addf %19, %22 : vector<1x8x1xf32>
    %24 = math.rsqrt %23 : vector<1x8x1xf32>
    %25 = vector.broadcast %24 : vector<1x8x1xf32> to vector<1x8x32xf32>
    %26 = arith.mulf %21, %25 : vector<1x8x32xf32>
    %c0_11 = arith.constant 0 : index
    %c0_12 = arith.constant 0 : index
    %27 = vector.load %arg5[%c0_11, %c0_12] : memref<1x32xf32, #tpu.memory_space<vmem>>, vector<1x32xf32>
    %28 = vector.shape_cast %27 : vector<1x32xf32> to vector<1x1x32xf32>
    %29 = vector.broadcast %28 : vector<1x1x32xf32> to vector<1x8x32xf32>
    %30 = arith.mulf %26, %29 : vector<1x8x32xf32>
    %c0_13 = arith.constant 0 : index
    %c0_14 = arith.constant 0 : index
    %31 = vector.load %arg6[%c0_13, %c0_14] : memref<1x32xf32, #tpu.memory_space<vmem>>, vector<1x32xf32>
    %32 = vector.shape_cast %31 : vector<1x32xf32> to vector<1x1x32xf32>
    %33 = vector.broadcast %32 : vector<1x1x32xf32> to vector<1x8x32xf32>
    %34 = arith.addf %30, %33 : vector<1x8x32xf32>
    %35 = arith.truncf %34 : vector<1x8x32xf32> to vector<1x8x32xbf16>
    %c0_15 = arith.constant 0 : index
    %c0_16 = arith.constant 0 : index
    %c0_17 = arith.constant 0 : index
    %36 = vector.load %arg7[%c0_15, %c0_16, %c0_17] : memref<1x8x32xbf16, #tpu.memory_space<vmem>>, vector<1x8x32xbf16>
    tpu.vector_store %arg7[%c0_15, %c0_16, %c0_17], %35 {strides = array<i32>} : memref<1x8x32xbf16, #tpu.memory_space<vmem>>, vector<1x8x32xbf16>,
    return
  }
  func.func @transform_0(%arg0: i32, %arg1: i32) -> (i32, i32, i32) {
    %c0_i32 = arith.constant 0 : i32
    %c0_i32_0 = arith.constant 0 : i32
    return %arg0, %arg1, %c0_i32 : i32, i32, i32
  }
  func.func @transform_1(%arg0: i32, %arg1: i32) -> (i32, i32, i32) {
    %c0_i32 = arith.constant 0 : i32
    %c0_i32_0 = arith.constant 0 : i32
    return %arg0, %arg1, %c0_i32 : i32, i32, i32
  }
  func.func @transform_2(%arg0: i32, %arg1: i32) -> (i32, i32) {
    %c0_i32 = arith.constant 0 : i32
    %c0_i32_0 = arith.constant 0 : i32
    return %arg1, %c0_i32 : i32, i32
  }
  func.func @transform_3(%arg0: i32, %arg1: i32) -> (i32, i32) {
    %c0_i32 = arith.constant 0 : i32
    %c0_i32_0 = arith.constant 0 : i32
    %c0_i32_1 = arith.constant 0 : i32
    return %c0_i32, %c0_i32_0 : i32, i32
  }
  func.func @transform_4(%arg0: i32, %arg1: i32) -> (i32, i32) {
    %c0_i32 = arith.constant 0 : i32
    %c0_i32_0 = arith.constant 0 : i32
    %c0_i32_1 = arith.constant 0 : i32
    return %c0_i32, %c0_i32_0 : i32, i32
  }
  func.func @transform_5(%arg0: i32, %arg1: i32) -> (i32, i32, i32) {
    %c0_i32 = arith.constant 0 : i32
    %c0_i32_0 = arith.constant 0 : i32
    return %arg0, %arg1, %c0_i32 : i32, i32, i32
  }
}

</mosaic_0001>

<llo_original>
// kernel: tpu_custom_call.1
$region0: #{tpu_custom_call.1}
  #allocation0 [shape = 'u32[]', space=smem, size = 0x4, offset = 0x4, fixed_abs, tag = 'smem constant byte address 0x4 - core index']
  #allocation1 [shape = 'u32[144,128]{1,0:T(1,128)}', space=vmem, size = 0x12000, scoped, tag = 'internal scratch']
  %s0 = inlined_call_operand.hbm [shape: bf16[2,8,32], index: 0, kind: input, shape index: {}]
  %s1 = inlined_call_operand.hbm [shape: bf16[2,8,32], index: 1, kind: input, shape index: {}]
  %s2 = inlined_call_operand.vmem [shape: bf16[8,32], index: 2, kind: input, shape index: {}]
  %s3 = inlined_call_operand.vmem [shape: f32[1,32], index: 3, kind: input, shape index: {}]
  %s4 = inlined_call_operand.vmem [shape: f32[1,32], index: 4, kind: input, shape index: {}]
  %s5 = inlined_call_operand.hbm [shape: bf16[2,8,32], index: 5, kind: output, shape index: {}]
  %s6 = sld [smem:[#allocation0]]
  $region61: #{tpu_custom_call.1} parent=0
    _
  %s8 = ssub.s32 1, %s6
  %s9 = scalar_select 0, %s8, %s6
  $region1: #{tpu_custom_call.1} parent=0
    #allocation2 [shape = 'u8[4096]{0}', space=vmem, size = 0x1000, scoped, tag = 'input window, operand 0']
    #allocation3 [shape = 's32[2]{0}', space=sflag, size = 0x8, scoped, tag = 'scoped memory for tpu_custom_call.1']
    #allocation4 [shape = 's32[2]{0}', space=sflag, size = 0x8, scoped, tag = 'scoped memory for tpu_custom_call.1']
    #allocation5 [shape = 'u8[4096]{0}', space=vmem, size = 0x1000, scoped, tag = 'input window, operand 1']
    #allocation6 [shape = 's32[2]{0}', space=sflag, size = 0x8, scoped, tag = 'scoped memory for tpu_custom_call.1']
    #allocation7 [shape = 'u8[4096]{0}', space=vmem, size = 0x1000, scoped, tag = 'output window, operand 0']
    %10 = vsyncpa [#allocation3], 0
    %s11 = scalar_lea.sflag [#allocation3], 1
    %12 = vsyncpa %s11, 0
    %13 = vsyncpa [#allocation6], 0
    %s14 = scalar_lea.sflag [#allocation6], 1
    %15 = vsyncpa %s14, 0
    %16 = vsyncpa [#allocation4], 0
    %s17 = scalar_lea.sflag [#allocation4], 1
    %18 = vsyncpa %s17, 0
    loop: start=0, step=1, limit=4
    $region2: #{tpu_custom_call.1} parent=1 // loop_pre_header
      _
    $region3: #{tpu_custom_call.1} parent=1 // loop_header
      %s20 = sphi 0, %s24
      %p21 = scmp.ge.s32.totalorder %s20, 4
      %s27 = sphi 0, %s39
      %s28 = sphi 0, %s35
      %s29 = sphi 0, %s27
      %s30 = sphi 0, %s28
      %s31 = sphi 0, %s29
      %s32 = sphi 0, %s30
      %s44 = sphi 0, %s46
      %s47 = sphi 0, %s44
      %s48 = sphi 0, %s47
      %s64 = sphi 0, %s48
      %s72 = sphi 0, %s74
      %s75 = sphi 0, %s72
      %s76 = sphi 0, %s75
      %s92 = sphi 0, %s76
      %s98 = sphi 0, %s100
      %s101 = sphi 0, %s98
      %s102 = sphi 0, %s101
      %s118 = sphi 0, %s102
      %s122 = sphi 0, %s122
      %s124 = sphi 0, %s122
      %s125 = sphi 0, %s124
      %s139 = sphi 0, %s125
      %s143 = sphi 0, %s143
      %s145 = sphi 0, %s143
      %s146 = sphi 0, %s145
      %s160 = sphi 0, %s146
      %s168 = sphi 0, %s170
      %s171 = sphi 0, %s168
      %s172 = sphi 0, %s171
      %s188 = sphi 0, %s172
    $region4: #{tpu_custom_call.1} parent=1 // loop_header_branch
      %23 = sbr.rel (%p21) target = $region8
    $region5: #{tpu_custom_call.1} parent=1 // loop_body
      %s25 = ssub.s32 %s20, 1
      %s26 = ssub.s32 %s20, 2
      %s33 = sadd.s32 1, %s28
      %p34 = scmp.ge.s32.totalorder %s33, 1
      %s35 = scalar_select %p34, 0, %s33
      %s36 = sadd.s32 1, %s27
      %s37 = scalar_select %p34, %s36, %s27
      %p38 = scmp.ge.s32.totalorder %s37, 2
      %s39 = scalar_select %p38, 0, %s37
      %s40 = ssub.s32 %s27, %s39
      %s41 = ssub.s32 %s28, %s35
      %s42 = sor.u32 %s40, %s41
      %p43 = scmp.eq.s32.totalorder %s42, 0
      %s45 = sadd.s32 %s44, 1
      %s46 = scalar_select %p43, %s44, %s45
      %p49 = pneg %p43
      %p50 = scmp.eq.s32.totalorder %s20, 1
      %p51 = por %p49, %p50
      %p52 = scmp.ne.s32.totalorder %s44, %s47
      %p53 = scmp.eq.s32.totalorder %s20, 0
      %p54 = por %p52, %p53
      %p55 = scmp.ne.s32.totalorder %s44, %s47
      %p56 = scmp.eq.s32.totalorder %s25, 1
      %p57 = por %p55, %p56
      %p58 = scmp.ne.s32.totalorder %s47, %s48
      %p59 = scmp.eq.s32.totalorder %s25, 0
      %p60 = por %p58, %p59
      %p61 = scmp.ne.s32.totalorder %s47, %s48
      %p62 = scmp.eq.s32.totalorder %s26, 1
      %p63 = por %p61, %p62
      %p65 = scmp.ne.s32.totalorder %s48, %s64
      %p66 = scmp.eq.s32.totalorder %s26, 0
      %p67 = por %p65, %p66
      %s68 = ssub.s32 %s27, %s39
      %s69 = ssub.s32 %s28, %s35
      %s70 = sor.u32 %s68, %s69
      %p71 = scmp.eq.s32.totalorder %s70, 0
      %s73 = sadd.s32 %s72, 1
      %s74 = scalar_select %p71, %s72, %s73
      %p77 = pneg %p71
      %p78 = scmp.eq.s32.totalorder %s20, 1
      %p79 = por %p77, %p78
      %p80 = scmp.ne.s32.totalorder %s72, %s75
      %p81 = scmp.eq.s32.totalorder %s20, 0
      %p82 = por %p80, %p81
      %p83 = scmp.ne.s32.totalorder %s72, %s75
      %p84 = scmp.eq.s32.totalorder %s25, 1
      %p85 = por %p83, %p84
      %p86 = scmp.ne.s32.totalorder %s75, %s76
      %p87 = scmp.eq.s32.totalorder %s25, 0
      %p88 = por %p86, %p87
      %p89 = scmp.ne.s32.totalorder %s75, %s76
      %p90 = scmp.eq.s32.totalorder %s26, 1
      %p91 = por %p89, %p90
      %p93 = scmp.ne.s32.totalorder %s76, %s92
      %p94 = scmp.eq.s32.totalorder %s26, 0
      %p95 = por %p93, %p94
      %s96 = ssub.s32 %s28, %s35
      %p97 = scmp.eq.s32.totalorder %s96, 0
      %s99 = sadd.s32 %s98, 1
      %s100 = scalar_select %p97, %s98, %s99
      %p103 = pneg %p97
      %p104 = scmp.eq.s32.totalorder %s20, 1
      %p105 = por %p103, %p104
      %p106 = scmp.ne.s32.totalorder %s98, %s101
      %p107 = scmp.eq.s32.totalorder %s20, 0
      %p108 = por %p106, %p107
      %p109 = scmp.ne.s32.totalorder %s98, %s101
      %p110 = scmp.eq.s32.totalorder %s25, 1
      %p111 = por %p109, %p110
      %p112 = scmp.ne.s32.totalorder %s101, %s102
      %p113 = scmp.eq.s32.totalorder %s25, 0
      %p114 = por %p112, %p113
      %p115 = scmp.ne.s32.totalorder %s101, %s102
      %p116 = scmp.eq.s32.totalorder %s26, 1
      %p117 = por %p115, %p116
      %p119 = scmp.ne.s32.totalorder %s102, %s118
      %p120 = scmp.eq.s32.totalorder %s26, 0
      %p121 = por %p119, %p120
      %s123 = sadd.s32 %s122, 1
      %p126 = scmp.eq.s32.totalorder %s20, 1
      %p127 = scmp.ne.s32.totalorder %s122, %s124
      %p128 = scmp.eq.s32.totalorder %s20, 0
      %p129 = por %p127, %p128
      %p130 = scmp.ne.s32.totalorder %s122, %s124
      %p131 = scmp.eq.s32.totalorder %s25, 1
      %p132 = por %p130, %p131
      %p133 = scmp.ne.s32.totalorder %s124, %s125
      %p134 = scmp.eq.s32.totalorder %s25, 0
      %p135 = por %p133, %p134
      %p136 = scmp.ne.s32.totalorder %s124, %s125
      %p137 = scmp.eq.s32.totalorder %s26, 1
      %p138 = por %p136, %p137
      %p140 = scmp.ne.s32.totalorder %s125, %s139
      %p141 = scmp.eq.s32.totalorder %s26, 0
      %p142 = por %p140, %p141
      %s144 = sadd.s32 %s143, 1
      %p147 = scmp.eq.s32.totalorder %s20, 1
      %p148 = scmp.ne.s32.totalorder %s143, %s145
      %p149 = scmp.eq.s32.totalorder %s20, 0
      %p150 = por %p148, %p149
      %p151 = scmp.ne.s32.totalorder %s143, %s145
      %p152 = scmp.eq.s32.totalorder %s25, 1
      %p153 = por %p151, %p152
      %p154 = scmp.ne.s32.totalorder %s145, %s146
      %p155 = scmp.eq.s32.totalorder %s25, 0
      %p156 = por %p154, %p155
      %p157 = scmp.ne.s32.totalorder %s145, %s146
      %p158 = scmp.eq.s32.totalorder %s26, 1
      %p159 = por %p157, %p158
      %p161 = scmp.ne.s32.totalorder %s146, %s160
      %p162 = scmp.eq.s32.totalorder %s26, 0
      %p163 = por %p161, %p162
      %s164 = ssub.s32 %s27, %s39
      %s165 = ssub.s32 %s28, %s35
      %s166 = sor.u32 %s164, %s165
      %p167 = scmp.eq.s32.totalorder %s166, 0
      %s169 = sadd.s32 %s168, 1
      %s170 = scalar_select %p167, %s168, %s169
      %p173 = pneg %p167
      %p174 = scmp.eq.s32.totalorder %s20, 1
      %p175 = por %p173, %p174
      %p176 = scmp.ne.s32.totalorder %s168, %s171
      %p177 = scmp.eq.s32.totalorder %s20, 0
      %p178 = por %p176, %p177
      %p179 = scmp.ne.s32.totalorder %s168, %s171
      %p180 = scmp.eq.s32.totalorder %s25, 1
      %p181 = por %p179, %p180
      %p182 = scmp.ne.s32.totalorder %s171, %s172
      %p183 = scmp.eq.s32.totalorder %s25, 0
      %p184 = por %p182, %p183
      %p185 = scmp.ne.s32.totalorder %s171, %s172
      %p186 = scmp.eq.s32.totalorder %s26, 1
      %p187 = por %p185, %p186
      %p189 = scmp.ne.s32.totalorder %s172, %s188
      %p190 = scmp.eq.s32.totalorder %s26, 0
      %p191 = por %p189, %p190
      %p192 = scmp.le.s32.totalorder 1, %s20
      %p193 = scmp.lt.s32.totalorder %s20, 3
      %p194 = pnand %p192, %p193
      %p195 = pneg %p194
      // Predicated region
      $region9: #{tpu_custom_call.1} parent=5 // pred_check
        _
      $region10: #{tpu_custom_call.1} parent=5 // pred_check_branch
        %197 = sbr.rel (%p194) target = $region12
      $region11: #{tpu_custom_call.1} parent=5 // pred_region
        %s198 = ssub.s32 %s20, 1
        // Predicated region
        $region13: #{tpu_custom_call.1} parent=11 // pred_check
          %p199 = pneg %p114
        $region14: #{tpu_custom_call.1} parent=11 // pred_check_branch
          %201 = sbr.rel (%p199) target = $region16
        $region15: #{tpu_custom_call.1} parent=11 // pred_region
          %p202 = scmp.lt.s32.totalorder %s30, 0
          %s203 = scalar_select %p202, %s30, 0
          %s204 = smul.addr %s203, 4
          %s205 = scalar_lea.vmem %s2, %s204
        $region16: #{tpu_custom_call.1} parent=11 // pred_fallthru
          _
        // Predicated region
        $region17: #{tpu_custom_call.1} parent=11 // pred_check
          %p206 = pneg %p135
        $region18: #{tpu_custom_call.1} parent=11 // pred_check_branch
          %208 = sbr.rel (%p206) target = $region20
        $region19: #{tpu_custom_call.1} parent=11 // pred_region
          _
        $region20: #{tpu_custom_call.1} parent=11 // pred_fallthru
          _
        // Predicated region
        $region21: #{tpu_custom_call.1} parent=11 // pred_check
          %p209 = pneg %p156
        $region22: #{tpu_custom_call.1} parent=11 // pred_check_branch
          %211 = sbr.rel (%p209) target = $region24
        $region23: #{tpu_custom_call.1} parent=11 // pred_region
          _
        $region24: #{tpu_custom_call.1} parent=11 // pred_fallthru
          _
      $region12: #{tpu_custom_call.1} parent=5 // pred_fallthru
        _
      %p212 = scmp.lt.s32.totalorder %s20, 2
      // Predicated region
      $region25: #{tpu_custom_call.1} parent=5 // pred_check
        %p213 = pneg %p212
      $region26: #{tpu_custom_call.1} parent=5 // pred_check_branch
        %215 = sbr.rel (%p213) target = $region28
      $region27: #{tpu_custom_call.1} parent=5 // pred_region
        // Predicated region
        $region29: #{tpu_custom_call.1} parent=27 // pred_check
          %p216 = pneg %p54
        $region30: #{tpu_custom_call.1} parent=27 // pred_check_branch
          %218 = sbr.rel (%p216) target = $region32
        $region31: #{tpu_custom_call.1} parent=27 // pred_region
          %s219 = sand.u32 %s44, 1
          %s220 = scalar_lea.sflag [#allocation3], %s219
          %s221 = sand.u32 %s44, 1
          %s222 = smul.addr %s221, 4
          %s223 = scalar_lea.vmem [#allocation2], %s222
          %s225 = ssub.s32 64, 64
          %226 = vsyncadd %s220, %s225
          %s227 = sadd.s32 %s28, %s27
          %s228 = smul.addr %s227, 64
          %s229 = scalar_lea.hbm %s0, %s228
          %s231 = sshll.u32 %s223, 4
          %s232 = int_to_ptr.vmem [resolvable:$true] %s231
          %234 = dma.hbm_to_vmem [thread:$0]  %s229, 64, %s232, %s220
        $region32: #{tpu_custom_call.1} parent=27 // pred_fallthru
          _
        // Predicated region
        $region33: #{tpu_custom_call.1} parent=27 // pred_check
          %p235 = pneg %p82
        $region34: #{tpu_custom_call.1} parent=27 // pred_check_branch
          %237 = sbr.rel (%p235) target = $region36
        $region35: #{tpu_custom_call.1} parent=27 // pred_region
          %s238 = sand.u32 %s72, 1
          %s239 = scalar_lea.sflag [#allocation6], %s238
          %s240 = sand.u32 %s72, 1
          %s241 = smul.addr %s240, 4
          %s242 = scalar_lea.vmem [#allocation5], %s241
          %s244 = ssub.s32 64, 64
          %245 = vsyncadd %s239, %s244
          %s246 = sadd.s32 %s28, %s27
          %s247 = smul.addr %s246, 64
          %s248 = scalar_lea.hbm %s1, %s247
          %s250 = sshll.u32 %s242, 4
          %s251 = int_to_ptr.vmem [resolvable:$true] %s250
          %253 = dma.hbm_to_vmem [thread:$0]  %s248, 64, %s251, %s239
        $region36: #{tpu_custom_call.1} parent=27 // pred_fallthru
          _
      $region28: #{tpu_custom_call.1} parent=5 // pred_fallthru
        _
      %p254 = scmp.le.s32.totalorder 1, %s20
      %p255 = scmp.lt.s32.totalorder %s20, 3
      %p256 = pnand %p254, %p255
      %p257 = pneg %p256
      // Predicated region
      $region37: #{tpu_custom_call.1} parent=5 // pred_check
        _
      $region38: #{tpu_custom_call.1} parent=5 // pred_check_branch
        %259 = sbr.rel (%p256) target = $region40
      $region39: #{tpu_custom_call.1} parent=5 // pred_region
        %s260 = ssub.s32 %s20, 1
        %s261 = sand.u32 %s47, 1
        %s262 = scalar_lea.sflag [#allocation3], %s261
        %s263 = sand.u32 %s47, 1
        %s264 = smul.addr %s263, 4
        %s265 = scalar_lea.vmem [#allocation2], %s264
        // Predicated region
        $region41: #{tpu_custom_call.1} parent=39 // pred_check
          %p266 = pneg %p60
        $region42: #{tpu_custom_call.1} parent=39 // pred_check_branch
          %268 = sbr.rel (%p266) target = $region44
        $region43: #{tpu_custom_call.1} parent=39 // pred_region
          %269 = dma.done %s262, 64
        $region44: #{tpu_custom_call.1} parent=39 // pred_fallthru
          _
        %s270 = sand.u32 %s75, 1
        %s271 = scalar_lea.sflag [#allocation6], %s270
        %s272 = sand.u32 %s75, 1
        %s273 = smul.addr %s272, 4
        %s274 = scalar_lea.vmem [#allocation5], %s273
        // Predicated region
        $region45: #{tpu_custom_call.1} parent=39 // pred_check
          %p275 = pneg %p88
        $region46: #{tpu_custom_call.1} parent=39 // pred_check_branch
          %277 = sbr.rel (%p275) target = $region48
        $region47: #{tpu_custom_call.1} parent=39 // pred_region
          %278 = dma.done %s271, 64
        $region48: #{tpu_custom_call.1} parent=39 // pred_fallthru
          _
        %s279 = sand.u32 %s47, 1
        %s280 = scalar_lea.sflag [#allocation3], %s279
        %s281 = sand.u32 %s47, 1
        %s282 = smul.addr %s281, 4
        %s283 = scalar_lea.vmem [#allocation2], %s282
        %p284 = pneg %p60
        %p285 = pneg %p57
        %s286 = sand.u32 %s75, 1
        %s287 = scalar_lea.sflag [#allocation6], %s286
        %s288 = sand.u32 %s75, 1
        %s289 = smul.addr %s288, 4
        %s290 = scalar_lea.vmem [#allocation5], %s289
        %p291 = pneg %p88
        %p292 = pneg %p85
        %p293 = scmp.lt.s32.totalorder %s30, 0
        %s294 = scalar_select %p293, %s30, 0
        %s295 = smul.addr %s294, 4
        %s296 = scalar_lea.vmem %s2, %s295
        %p297 = pneg %p114
        %p298 = pneg %p111
        %p299 = pneg %p135
        %p300 = pneg %p132
        %p301 = pneg %p156
        %p302 = pneg %p153
        %p303 = pneg %p184
        %p304 = pneg %p181
        %s305 = sand.u32 %s171, 1
        %s306 = scalar_lea.sflag [#allocation4], %s305
        %s307 = sand.u32 %s171, 1
        %s308 = smul.addr %s307, 4
        %s309 = scalar_lea.vmem [#allocation7], %s308
        %p310 = scmp.lt.s32.totalorder %s30, 0
        %s311 = scalar_select %p310, %s30, 0
        %s312 = smul.addr %s311, 4
        %s313 = scalar_lea.vmem %s2, %s312
        %v314 = vld [vmem:[%s265] sm:$0xf]
        %v315 = vunpack.c.l.bf16 %v314
        %v316 = vld [vmem:[%s274] sm:$0xf]
        %v317 = vunpack.c.l.bf16 %v316
        %v318 = vadd.f32 %v315, %v317
        %v319 = vld [vmem:[%s313] sm:$0xf]
        %v320 = vunpack.c.l.bf16 %v319
        %v321 = vadd.f32 %v318, %v320
        %vm322 = vcmask 261120
        %v323 = vsel %vm322, %v321, 0.0
        %324 = vadd.xlane.f32.xlu0 %v323
        %v325 = vpop.xlane.xlu0 %324
        %v326 = vrcp.pop 32.0
        %v327 = vmul.f32 %v325, %v326
        %v328 = vsub.f32 %v321, %v327
        %v329 = vmul.f32 %v328, %v328
        %v330 = vsel %vm322, %v329, 0.0
        %331 = vadd.xlane.f32.xlu0 %v330
        %v332 = vpop.xlane.xlu0 %331
        %v333 = vmul.f32 %v332, %v326
        %v334 = vadd.f32 %v333, 1e-12
        %v335 = vrsqrt.pop %v334
        %v336 = vmul.f32 %v328, %v335
        %v337 = vld [vmem:[%s3] sm:$0x1]
        %v339 = vlaneseq
        %v340 = vshrl.u32 %v339, 7
        %v341 = vsub.s32 0, %v340
        %v342 = vrot.slane %v337, %v341
        %v344 = vmul.f32 %v336, %v342
        %v345 = vld [vmem:[%s4] sm:$0x1]
        %v347 = vlaneseq
        %v348 = vshrl.u32 %v347, 7
        %v349 = vsub.s32 0, %v348
        %v350 = vrot.slane %v345, %v349
        %v352 = vadd.f32 %v344, %v350
        %v353 = vpack.c.bf16 %v352, %v352
        %vm354 = vcmask 257024
        %355 = vst.msk [vmem:[%s309] sm:$0xf] %vm354, %v353
        %s356 = sand.u32 %s171, 1
        %s357 = scalar_lea.sflag [#allocation4], %s356
        %s358 = sand.u32 %s171, 1
        %s359 = smul.addr %s358, 4
        %s360 = scalar_lea.vmem [#allocation7], %s359
        // Predicated region
        $region49: #{tpu_custom_call.1} parent=39 // pred_check
          %p361 = pneg %p181
        $region50: #{tpu_custom_call.1} parent=39 // pred_check_branch
          %363 = sbr.rel (%p361) target = $region52
        $region51: #{tpu_custom_call.1} parent=39 // pred_region
          %s365 = ssub.s32 64, 64
          %366 = vsyncadd %s357, %s365
          %s367 = sadd.s32 %s30, %s29
          %s368 = smul.addr %s367, 64
          %s369 = scalar_lea.hbm %s5, %s368
          %s371 = sshll.u32 %s360, 4
          %s372 = int_to_ptr.vmem [resolvable:$true] %s371
          %374 = dma.vmem_to_hbm [thread:$0]  %s372, 64, %s369, %s357
        $region52: #{tpu_custom_call.1} parent=39 // pred_fallthru
          _
      $region40: #{tpu_custom_call.1} parent=5 // pred_fallthru
        _
      %p375 = scmp.le.s32.totalorder 2, %s20
      // Predicated region
      $region53: #{tpu_custom_call.1} parent=5 // pred_check
        %p376 = pneg %p375
      $region54: #{tpu_custom_call.1} parent=5 // pred_check_branch
        %378 = sbr.rel (%p376) target = $region56
      $region55: #{tpu_custom_call.1} parent=5 // pred_region
        %s379 = ssub.s32 %s20, 2
        // Predicated region
        $region57: #{tpu_custom_call.1} parent=55 // pred_check
          %p380 = pneg %p187
        $region58: #{tpu_custom_call.1} parent=55 // pred_check_branch
          %382 = sbr.rel (%p380) target = $region60
        $region59: #{tpu_custom_call.1} parent=55 // pred_region
          %s383 = sand.u32 %s172, 1
          %s384 = scalar_lea.sflag [#allocation4], %s383
          %s385 = sand.u32 %s172, 1
          %s386 = smul.addr %s385, 4
          %s387 = scalar_lea.vmem [#allocation7], %s386
          %388 = dma.done %s384, 64
        $region60: #{tpu_custom_call.1} parent=55 // pred_fallthru
          _
      $region56: #{tpu_custom_call.1} parent=5 // pred_fallthru
        _
    $region6: #{tpu_custom_call.1} parent=1 // loop_footer
      %s24 = sadd.s32 1, %s20
    $region7: #{tpu_custom_call.1} parent=1 // loop_footer_branch
      %19 = sbr.rel target = $region3
    $region8: #{tpu_custom_call.1} parent=1 // loop_exit
      _
    %389 = vsyncpa [#allocation3], 1
    %s390 = scalar_lea.sflag [#allocation3], 1
    %391 = vsyncpa %s390, 1
    %392 = vsyncpa [#allocation6], 1
    %s393 = scalar_lea.sflag [#allocation6], 1
    %394 = vsyncpa %s393, 1
    %395 = vsyncpa [#allocation4], 1
    %s396 = scalar_lea.sflag [#allocation4], 1
    %397 = vsyncpa %s396, 1

</llo_original>
